<compile_context>
chip_gen: v5e
topology: v5e:2x2
jax: 0.10.0
libtpu: 0.0.40
codegen_flags: <defaults>
</compile_context>

<pallas_src>
import functools

import jax
import jax.numpy as jnp
import numpy as np
from jax.experimental import pallas as pl
from jax.experimental.pallas import tpu as pltpu

# ---- Config (mirrors `args` in DistributedModel.__init__) -------------------
VOCAB = 32            # vocab_size
NFILTERS = 32         # args.nfilters
FILTER_SIZE = 3       # args.dist_filter_size (3 keeps fc2 in_features consistent)
POOL = 4              # args.pool_size
MAX_DOC_LEN = 16      # args.max_doc_length
MAX_Q_LEN = 8         # query length
L2 = MAX_DOC_LEN - POOL - 1     # = 11 == fc2 in_features == pooled doc length


# ---------------- Fused, gridded forward kernel ------------------------------
def duet_kernel(q_ref, d_ref, w_ref, p_ref, out_ref, *,
                N, Lq, Ld, V, C, lout_q, pool, fs):
    # ---- load raw activations (bf16 in HBM/VMEM, all compute in f32) --------
    xq = q_ref[...].reshape(Lq, V).astype(jnp.float32)          # (Lq, V)
    xd = d_ref[...].reshape(N * Ld, V).astype(jnp.float32)      # (N*Ld, V)
    x_all = jnp.concatenate([xq, xd], axis=0)                   # (Lq + N*Ld, V)

    def shift_rows(y, k):
        # result[r] = y[r + k]  (circular over the row axis).  Wrap / sequence-
        # boundary bleed only ever lands on positions masked or sliced away below.
        if k == 0:
            return y
        return jnp.concatenate([y[k:, :], y[:k, :]], axis=0)

    # ---- shared Conv1d: one contiguous M pass over (query ++ docs), fs tap dots
    y_taps = [jnp.dot(x_all, w_ref[k * V:(k + 1) * V, :],
                      preferred_element_type=jnp.float32) for k in range(fs)]
    conv_b = p_ref[Ld:Ld + 1, :]                                 # (1, C)
    conv_all = y_taps[0]
    for k in range(1, fs):
        conv_all = conv_all + shift_rows(y_taps[k], k)
    conv_all = conv_all + conv_b                                 # (Lq + N*Ld, C)

    # ---- query head: global max-pool over valid conv positions, fc1, tanh ----
    q_pool = jnp.max(conv_all[0:lout_q, :], axis=0, keepdims=True)        # (1, C)
    w1 = w_ref[fs * V + C:fs * V + 2 * C, :]                     # fc1_w.T
    b1 = p_ref[Ld + 1:Ld + 2, :]
    q_rep = jnp.tanh(jnp.dot(q_pool, w1,
                             preferred_element_type=jnp.float32) + b1)    # (1, C)

    # ---- doc path: stride-1 max_pool1d(pool) via row shifts -------------------
    conv_d = conv_all[Lq:, :]                # (N*Ld, C); valid rows l < Ld-fs+1 per doc
    pooled = conv_d
    for k in range(1, pool):
        pooled = jnp.maximum(pooled, shift_rows(conv_d, k))      # valid pooled rows l < l2

    # fc2 length reduction hoisted before the 1x1 convdoc (both linear):
    #   sum_l (q * (pooled_l @ Wd^T + bd)) * w2_l
    #     = q * ((sum_l pooled_l * w2_l) @ Wd^T + bd * sum_l w2_l)
    # Rows of w2 >= l2 are zero, masking padded/garbage pooled positions.
    w2_rows = p_ref[0:Ld, :].reshape(1, Ld, C)
    red = jnp.sum(pooled.reshape(N, Ld, C) * w2_rows, axis=1)    # (N, C)

    wd = w_ref[fs * V:fs * V + C, :]                             # convdoc_w.T
    bd_scaled = p_ref[Ld + 2:Ld + 3, :]                          # convdoc_b * sum(w2)
    doc_red = jnp.dot(red, wd,
                      preferred_element_type=jnp.float32) + bd_scaled     # (N, C)

    # ---- similarity + fc2 bias + tanh (q_rep broadcasts over the N docs) ------
    b2 = p_ref[Ld + 5:Ld + 6, 0:1]                               # (1, 1) scalar
    mapped = jnp.tanh(doc_red * q_rep + b2)                      # (N, C)

    # TODO(synk): nn.Dropout omitted -- identity at inference time.
    w3 = w_ref[fs * V + 2 * C:fs * V + 3 * C, :]                 # fc3_w.T
    b3 = p_ref[Ld + 3:Ld + 4, :]
    h = jnp.tanh(jnp.dot(mapped, w3,
                         preferred_element_type=jnp.float32) + b3)        # (N, C)

    # fc4 as a VPU multiply + lane reduction (no K=32 -> N=1 MXU pass)
    w4 = p_ref[Ld + 4:Ld + 5, :]                                 # fc4 weight row (1, C)
    b4 = p_ref[Ld + 6:Ld + 7, 0:1]                               # (1, 1) scalar
    s = jnp.tanh(jnp.sum(h * w4, axis=-1, keepdims=True) + b4)   # (N, 1)
    out_ref[...] = s.reshape(1, N, 1)


# ---------------- Wrapper (parameter packing / layout plumbing only) ----------
def distributed_model_forward(params, batch_queries, batch_clicks):
    B, Lq, V = batch_queries.shape
    _, N, Ld, Vd = batch_clicks.shape
    assert Vd == V
    FS, _, C = params["conv_w"].shape

    lout_q = Lq - FS + 1
    lout_d = Ld - FS + 1
    l2 = lout_d - POOL + 1                   # == max_doc_length - pool_size - 1
    # --- masking invariants the kernel relies on (see review) ------------------
    assert l2 == params["fc2_w"].shape[1], "fc2 in_features mismatch"
    assert l2 + (POOL - 1) + (FS - 1) <= Ld, "valid outputs would read shifted garbage"
    assert Lq % 8 == 0 and Ld % 8 == 0, "kernel assumes 8-aligned sequence lengths"
    assert lout_q >= 1

    # bf16 activations in HBM (halves the dominant input bytes); matmuls accumulate
    # f32 and all post-matmul VPU/EUP math stays f32.
    q_bf = batch_queries.astype(jnp.bfloat16)
    d_bf = batch_clicks.astype(jnp.bfloat16)

    # Packed weight slab: [conv tap0; tap1; tap2; convdoc_w.T; fc1_w.T; fc3_w.T]
    w_stack = jnp.concatenate(
        [params["conv_w"].reshape(FS * V, C).astype(jnp.float32),
         params["convdoc_w"].T.astype(jnp.float32),
         params["fc1_w"].T.astype(jnp.float32),
         params["fc3_w"].T.astype(jnp.float32)], axis=0)         # (FS*V + 3C, C)

    # Packed bias / vector slab (rows, C), padded to a multiple of 8 rows.
    wsum = jnp.sum(params["fc2_w"][0])
    w2_full = jnp.zeros((Ld,), jnp.float32).at[:l2].set(params["fc2_w"][0])
    p_slab = jnp.concatenate(
        [jnp.broadcast_to(w2_full[:, None], (Ld, C)),            # rows [0, Ld): fc2 w (0 past l2)
         params["conv_b"].reshape(1, C),                         # Ld
         params["fc1_b"].reshape(1, C),                          # Ld+1
         (params["convdoc_b"] * wsum).reshape(1, C),             # Ld+2
         params["fc3_b"].reshape(1, C),                          # Ld+3
         params["fc4_w"].reshape(1, C),                          # Ld+4
         jnp.full((1, C), params["fc2_b"][0, 0], jnp.float32),   # Ld+5
         jnp.full((1, C), params["fc4_b"][0, 0], jnp.float32),   # Ld+6
         ], axis=0).astype(jnp.float32)
    pad_rows = (-p_slab.shape[0]) % 8
    p_slab = jnp.pad(p_slab, ((0, pad_rows), (0, 0)))

    kernel = functools.partial(
        duet_kernel, N=N, Lq=Lq, Ld=Ld, V=V, C=C,
        lout_q=lout_q, pool=POOL, fs=FS)

    out = pl.pallas_call(
        kernel,
        grid=(B,),
        in_specs=[
            pl.BlockSpec((1, Lq, V), lambda i: (i, 0, 0)),
            pl.BlockSpec((1, N, Ld, V), lambda i: (i, 0, 0, 0)),
            pl.BlockSpec(w_stack.shape, lambda i: (0, 0)),       # VMEM-resident across steps
            pl.BlockSpec(p_slab.shape, lambda i: (0, 0)),        # VMEM-resident across steps
        ],
        out_specs=pl.BlockSpec((1, N, 1), lambda i: (i, 0, 0)),
        out_shape=jax.ShapeDtypeStruct((B, N, 1), jnp.float32),
        compiler_params=pltpu.CompilerParams(
            dimension_semantics=("parallel",)),
    )(q_bf, d_bf, w_stack, p_slab)
    return out.reshape(B, N)


# ---------------- Pure-JAX reference (for verification) ----------------------
def reference_forward(params, batch_queries, batch_clicks):
    B, Lq, V = batch_queries.shape
    _, N, Ld, _ = batch_clicks.shape
    C = NFILTERS
    q = batch_queries.astype(jnp.float32)
    d = batch_clicks.reshape(B * N, Ld, V).astype(jnp.float32)

    def conv(x):
        lout = x.shape[1] - FILTER_SIZE + 1
        acc = jnp.zeros((x.shape[0], lout, C), jnp.float32)
        for k in range(FILTER_SIZE):
            acc = acc + jnp.einsum("blv,vc->blc",
                                   x[:, k:k + lout, :], params["conv_w"][k])
        return acc + params["conv_b"]

    cq = conv(q)
    cd = conv(d)
    q_rep = jnp.tanh(jnp.max(cq, axis=1) @ params["fc1_w"].T + params["fc1_b"])
    pooled = cd[:, 0:L2, :]
    for k in range(1, POOL):
        pooled = jnp.maximum(pooled, cd[:, k:k + L2, :])
    doc_rep = jnp.einsum("blc,dc->bld", pooled,
                         params["convdoc_w"]) + params["convdoc_b"]
    sim = jnp.repeat(q_rep, N, axis=0)[:, None, :] * doc_rep          # (BN, L2, C)
    mapped = jnp.tanh(jnp.einsum("blc,l->bc", sim, params["fc2_w"][0])
                      + params["fc2_b"][0, 0])
    h = jnp.tanh(mapped @ params["fc3_w"].T + params["fc3_b"])
    s = jnp.tanh(h @ params["fc4_w"].T + params["fc4_b"])             # (BN, 1)
    return s.reshape(B, N)


# ---------------- Deterministic parameter init --------------------------------
def init_params(key):
    ks = jax.random.split(key, 12)

    def u(k, shape, fan_in):
        bound = 1.0 / np.sqrt(fan_in)
        return jax.random.uniform(k, shape, jnp.float32, -bound, bound)

    C, V, FS = NFILTERS, VOCAB, FILTER_SIZE
    return {
        # PyTorch Conv1d weight (C_out, V, FS) stored transposed as (FS, V, C_out)
        "conv_w": u(ks[0], (FS, V, C), V * FS),
        "conv_b": u(ks[1], (1, C), V * FS),
        "fc1_w": u(ks[2], (C, C), C),
        "fc1_b": u(ks[3], (1, C), C),
        # Conv1d_doc weight (C_out, C_in, 1) stored squeezed as (C_out, C_in)
        "convdoc_w": u(ks[4], (C, C), C),
        "convdoc_b": u(ks[5], (1, C), C),
        "fc2_w": u(ks[6], (1, L2), L2),
        "fc2_b": u(ks[7], (1, 1), L2),
        "fc3_w": u(ks[8], (C, C), C),
        "fc3_b": u(ks[9], (1, C), C),
        "fc4_w": u(ks[10], (1, C), C),
        "fc4_b": u(ks[11], (1, 1), C),
    }


if __name__ == "__main__":
    key = jax.random.PRNGKey(0)
    kp, kq, kd = jax.random.split(key, 3)
    params = init_params(kp)

    B, N = 2, 3
    batch_queries = jax.random.normal(kq, (B, MAX_Q_LEN, VOCAB), jnp.float32)
    batch_clicks = jax.random.normal(kd, (B, N, MAX_DOC_LEN, VOCAB), jnp.float32)

    out = jax.jit(distributed_model_forward)(params, batch_queries, batch_clicks)
    out = jax.block_until_ready(out)

    # Compare against the f32 reference evaluated on the same bf16-rounded activations
    # the kernel consumes (the only intended numerical difference is that rounding).
    q_in = batch_queries.astype(jnp.bfloat16).astype(jnp.float32)
    d_in = batch_clicks.astype(jnp.bfloat16).astype(jnp.float32)
    ref = reference_forward(params, q_in, d_in)
    np.testing.assert_allclose(np.asarray(out), np.asarray(ref),
                               rtol=1e-4, atol=1e-4)
    print("KERNEL_OK")
</pallas_src>

<mosaic_0001>
module attributes {stable_mosaic.version = 11 : i64} {
  func.func @duet_kernel(%arg0: i32, %arg1: memref<1x8x32xbf16, #tpu.memory_space<vmem>>, %arg2: memref<1x3x16x32xbf16, #tpu.memory_space<vmem>>, %arg3: memref<192x32xf32, #tpu.memory_space<vmem>>, %arg4: memref<24x32xf32, #tpu.memory_space<vmem>>, %arg5: memref<1x3x1xf32, #tpu.memory_space<vmem>>) attributes {dimension_semantics = [#tpu.dimension_semantics<parallel>], iteration_bounds = array<i64: 2>, scalar_prefetch = 0 : i64, scratch_operands = 0 : i64, tpu.core_type = #tpu.core_type<tc>, window_params = [{transform_indices = @transform_0, window_bounds = array<i64: 1, 8, 32>}, {transform_indices = @transform_1, window_bounds = array<i64: 1, 3, 16, 32>}, {pipeline_mode = #tpu.pipeline_mode<synchronous>, transform_indices = @transform_2, window_bounds = array<i64: 192, 32>}, {pipeline_mode = #tpu.pipeline_mode<synchronous>, transform_indices = @transform_3, window_bounds = array<i64: 24, 32>}, {transform_indices = @transform_4, window_bounds = array<i64: 1, 3, 1>}]} {
    %c0 = arith.constant 0 : index
    %c0_0 = arith.constant 0 : index
    %c0_1 = arith.constant 0 : index
    %0 = vector.load %arg1[%c0, %c0_0, %c0_1] : memref<1x8x32xbf16, #tpu.memory_space<vmem>>, vector<1x8x32xbf16>
    %1 = vector.shape_cast %0 : vector<1x8x32xbf16> to vector<8x32xbf16>
    %2 = arith.extf %1 : vector<8x32xbf16> to vector<8x32xf32>
    %c0_2 = arith.constant 0 : index
    %c0_3 = arith.constant 0 : index
    %c0_4 = arith.constant 0 : index
    %c0_5 = arith.constant 0 : index
    %3 = vector.load %arg2[%c0_2, %c0_3, %c0_4, %c0_5] : memref<1x3x16x32xbf16, #tpu.memory_space<vmem>>, vector<1x3x16x32xbf16>
    %4 = vector.shape_cast %3 : vector<1x3x16x32xbf16> to vector<48x32xbf16>
    %5 = arith.extf %4 : vector<48x32xbf16> to vector<48x32xf32>
    %6 = tpu.concatenate %2, %5 in 0 : vector<8x32xf32>, vector<48x32xf32> -> vector<56x32xf32>
    %c0_6 = arith.constant 0 : index
    %c0_7 = arith.constant 0 : index
    %7 = vector.load %arg3[%c0_6, %c0_7] : memref<192x32xf32, #tpu.memory_space<vmem>>, vector<32x32xf32>
    %cst = arith.constant dense<0.000000e+00> : vector<56x32xf32>
    %8 = tpu.matmul %6, %7, %cst {dimension_numbers = #tpu.dot_dimension_numbers<[1], [0], [0], [1], [0, 0, 1, 1], [], []>} : vector<56x32xf32>, vector<32x32xf32>, vector<56x32xf32> -> vector<56x32xf32>
    %c32 = arith.constant 32 : index
    %c0_8 = arith.constant 0 : index
    %9 = vector.load %arg3[%c32, %c0_8] : memref<192x32xf32, #tpu.memory_space<vmem>>, vector<32x32xf32>
    %cst_9 = arith.constant dense<0.000000e+00> : vector<56x32xf32>
    %10 = tpu.matmul %6, %9, %cst_9 {dimension_numbers = #tpu.dot_dimension_numbers<[1], [0], [0], [1], [0, 0, 1, 1], [], []>} : vector<56x32xf32>, vector<32x32xf32>, vector<56x32xf32> -> vector<56x32xf32>
    %c64 = arith.constant 64 : index
    %c0_10 = arith.constant 0 : index
    %11 = vector.load %arg3[%c64, %c0_10] : memref<192x32xf32, #tpu.memory_space<vmem>>, vector<32x32xf32>
    %cst_11 = arith.constant dense<0.000000e+00> : vector<56x32xf32>
    %12 = tpu.matmul %6, %11, %cst_11 {dimension_numbers = #tpu.dot_dimension_numbers<[1], [0], [0], [1], [0, 0, 1, 1], [], []>} : vector<56x32xf32>, vector<32x32xf32>, vector<56x32xf32> -> vector<56x32xf32>
    %c16 = arith.constant 16 : index
    %c0_12 = arith.constant 0 : index
    %13 = vector.load %arg4[%c16, %c0_12] : memref<24x32xf32, #tpu.memory_space<vmem>>, vector<1x32xf32>
    %14 = vector.extract_strided_slice %10 {offsets = [1, 0], sizes = [55, 32], strides = [1, 1]} : vector<56x32xf32> to vector<55x32xf32>
    %15 = vector.extract_strided_slice %10 {offsets = [0, 0], sizes = [1, 32], strides = [1, 1]} : vector<56x32xf32> to vector<1x32xf32>
    %16 = tpu.concatenate %14, %15 in 0 : vector<55x32xf32>, vector<1x32xf32> -> vector<56x32xf32>
    %17 = arith.addf %8, %16 : vector<56x32xf32>
    %18 = vector.extract_strided_slice %12 {offsets = [2, 0], sizes = [54, 32], strides = [1, 1]} : vector<56x32xf32> to vector<54x32xf32>
    %19 = vector.extract_strided_slice %12 {offsets = [0, 0], sizes = [2, 32], strides = [1, 1]} : vector<56x32xf32> to vector<2x32xf32>
    %20 = tpu.concatenate %18, %19 in 0 : vector<54x32xf32>, vector<2x32xf32> -> vector<56x32xf32>
    %21 = arith.addf %17, %20 : vector<56x32xf32>
    %22 = vector.broadcast %13 : vector<1x32xf32> to vector<56x32xf32>
    %23 = arith.addf %21, %22 : vector<56x32xf32>
    %24 = vector.extract_strided_slice %23 {offsets = [0, 0], sizes = [6, 32], strides = [1, 1]} : vector<56x32xf32> to vector<6x32xf32>
    %cst_13 = arith.constant dense<0xFF800000> : vector<32xf32>
    %25 = vector.multi_reduction <maximumf>, %24, %cst_13 [0] : vector<6x32xf32> to vector<32xf32>
    %26 = vector.shape_cast %25 : vector<32xf32> to vector<1x32xf32>
    %c128 = arith.constant 128 : index
    %c0_14 = arith.constant 0 : index
    %27 = vector.load %arg3[%c128, %c0_14] : memref<192x32xf32, #tpu.memory_space<vmem>>, vector<32x32xf32>
    %c17 = arith.constant 17 : index
    %c0_15 = arith.constant 0 : index
    %28 = vector.load %arg4[%c17, %c0_15] : memref<24x32xf32, #tpu.memory_space<vmem>>, vector<1x32xf32>
    %cst_16 = arith.constant dense<0.000000e+00> : vector<1x32xf32>
    %29 = tpu.matmul %26, %27, %cst_16 {dimension_numbers = #tpu.dot_dimension_numbers<[1], [0], [0], [1], [0, 0, 1, 1], [], []>} : vector<1x32xf32>, vector<32x32xf32>, vector<1x32xf32> -> vector<1x32xf32>
    %30 = arith.addf %29, %28 : vector<1x32xf32>
    %31 = math.tanh %30 : vector<1x32xf32>
    %32 = vector.extract_strided_slice %23 {offsets = [8, 0], sizes = [48, 32], strides = [1, 1]} : vector<56x32xf32> to vector<48x32xf32>
    %33 = vector.extract_strided_slice %32 {offsets = [1, 0], sizes = [47, 32], strides = [1, 1]} : vector<48x32xf32> to vector<47x32xf32>
    %34 = vector.extract_strided_slice %32 {offsets = [0, 0], sizes = [1, 32], strides = [1, 1]} : vector<48x32xf32> to vector<1x32xf32>
    %35 = tpu.concatenate %33, %34 in 0 : vector<47x32xf32>, vector<1x32xf32> -> vector<48x32xf32>
    %36 = arith.maximumf %32, %35 : vector<48x32xf32>
    %37 = vector.extract_strided_slice %32 {offsets = [2, 0], sizes = [46, 32], strides = [1, 1]} : vector<48x32xf32> to vector<46x32xf32>
    %38 = vector.extract_strided_slice %32 {offsets = [0, 0], sizes = [2, 32], strides = [1, 1]} : vector<48x32xf32> to vector<2x32xf32>
    %39 = tpu.concatenate %37, %38 in 0 : vector<46x32xf32>, vector<2x32xf32> -> vector<48x32xf32>
    %40 = arith.maximumf %36, %39 : vector<48x32xf32>
    %41 = vector.extract_strided_slice %32 {offsets = [3, 0], sizes = [45, 32], strides = [1, 1]} : vector<48x32xf32> to vector<45x32xf32>
    %42 = vector.extract_strided_slice %32 {offsets = [0, 0], sizes = [3, 32], strides = [1, 1]} : vector<48x32xf32> to vector<3x32xf32>
    %43 = tpu.concatenate %41, %42 in 0 : vector<45x32xf32>, vector<3x32xf32> -> vector<48x32xf32>
    %44 = arith.maximumf %40, %43 : vector<48x32xf32>
    %c0_17 = arith.constant 0 : index
    %c0_18 = arith.constant 0 : index
    %45 = vector.load %arg4[%c0_17, %c0_18] : memref<24x32xf32, #tpu.memory_space<vmem>>, vector<16x32xf32>
    %46 = vector.shape_cast %45 : vector<16x32xf32> to vector<1x16x32xf32>
    %47 = vector.shape_cast %44 : vector<48x32xf32> to vector<3x16x32xf32>
    %48 = vector.broadcast %46 : vector<1x16x32xf32> to vector<3x16x32xf32>
    %49 = arith.mulf %47, %48 : vector<3x16x32xf32>
    %cst_19 = arith.constant dense<0.000000e+00> : vector<3x32xf32>
    %50 = vector.multi_reduction <add>, %49, %cst_19 [1] : vector<3x16x32xf32> to vector<3x32xf32>
    %c96 = arith.constant 96 : index
    %c0_20 = arith.constant 0 : index
    %51 = vector.load %arg3[%c96, %c0_20] : memref<192x32xf32, #tpu.memory_space<vmem>>, vector<32x32xf32>
    %c18 = arith.constant 18 : index
    %c0_21 = arith.constant 0 : index
    %52 = vector.load %arg4[%c18, %c0_21] : memref<24x32xf32, #tpu.memory_space<vmem>>, vector<1x32xf32>
    %cst_22 = arith.constant dense<0.000000e+00> : vector<3x32xf32>
    %53 = tpu.matmul %50, %51, %cst_22 {dimension_numbers = #tpu.dot_dimension_numbers<[1], [0], [0], [1], [0, 0, 1, 1], [], []>} : vector<3x32xf32>, vector<32x32xf32>, vector<3x32xf32> -> vector<3x32xf32>
    %54 = vector.broadcast %52 : vector<1x32xf32> to vector<3x32xf32>
    %55 = arith.addf %53, %54 : vector<3x32xf32>
    %c21 = arith.constant 21 : index
    %c0_23 = arith.constant 0 : index
    %56 = vector.load %arg4[%c21, %c0_23] : memref<24x32xf32, #tpu.memory_space<vmem>>, vector<1x1xf32>
    %57 = vector.broadcast %31 : vector<1x32xf32> to vector<3x32xf32>
    %58 = arith.mulf %55, %57 : vector<3x32xf32>
    %59 = vector.broadcast %56 : vector<1x1xf32> to vector<3x32xf32>
    %60 = arith.addf %58, %59 : vector<3x32xf32>
    %61 = math.tanh %60 : vector<3x32xf32>
    %c160 = arith.constant 160 : index
    %c0_24 = arith.constant 0 : index
    %62 = vector.load %arg3[%c160, %c0_24] : memref<192x32xf32, #tpu.memory_space<vmem>>, vector<32x32xf32>
    %c19 = arith.constant 19 : index
    %c0_25 = arith.constant 0 : index
    %63 = vector.load %arg4[%c19, %c0_25] : memref<24x32xf32, #tpu.memory_space<vmem>>, vector<1x32xf32>
    %cst_26 = arith.constant dense<0.000000e+00> : vector<3x32xf32>
    %64 = tpu.matmul %61, %62, %cst_26 {dimension_numbers = #tpu.dot_dimension_numbers<[1], [0], [0], [1], [0, 0, 1, 1], [], []>} : vector<3x32xf32>, vector<32x32xf32>, vector<3x32xf32> -> vector<3x32xf32>
    %65 = vector.broadcast %63 : vector<1x32xf32> to vector<3x32xf32>
    %66 = arith.addf %64, %65 : vector<3x32xf32>
    %67 = math.tanh %66 : vector<3x32xf32>
    %c20 = arith.constant 20 : index
    %c0_27 = arith.constant 0 : index
    %68 = vector.load %arg4[%c20, %c0_27] : memref<24x32xf32, #tpu.memory_space<vmem>>, vector<1x32xf32>
    %c22 = arith.constant 22 : index
    %c0_28 = arith.constant 0 : index
    %69 = vector.load %arg4[%c22, %c0_28] : memref<24x32xf32, #tpu.memory_space<vmem>>, vector<1x1xf32>
    %70 = vector.broadcast %68 : vector<1x32xf32> to vector<3x32xf32>
    %71 = arith.mulf %67, %70 : vector<3x32xf32>
    %cst_29 = arith.constant dense<0.000000e+00> : vector<3xf32>
    %72 = vector.multi_reduction <add>, %71, %cst_29 [1] : vector<3x32xf32> to vector<3xf32>
    %73 = vector.shape_cast %72 : vector<3xf32> to vector<3x1xf32>
    %74 = vector.broadcast %69 : vector<1x1xf32> to vector<3x1xf32>
    %75 = arith.addf %73, %74 : vector<3x1xf32>
    %76 = math.tanh %75 : vector<3x1xf32>
    %77 = vector.shape_cast %76 : vector<3x1xf32> to vector<1x3x1xf32>
    %c0_30 = arith.constant 0 : index
    %c0_31 = arith.constant 0 : index
    %c0_32 = arith.constant 0 : index
    %78 = vector.load %arg5[%c0_30, %c0_31, %c0_32] : memref<1x3x1xf32, #tpu.memory_space<vmem>>, vector<1x3x1xf32>
    tpu.vector_store %arg5[%c0_30, %c0_31, %c0_32], %77 {strides = array<i32>} : memref<1x3x1xf32, #tpu.memory_space<vmem>>, vector<1x3x1xf32>,
    return
  }
  func.func @transform_0(%arg0: i32) -> (i32, i32, i32) {
    %c0_i32 = arith.constant 0 : i32
    %c0_i32_0 = arith.constant 0 : i32
    %c0_i32_1 = arith.constant 0 : i32
    return %arg0, %c0_i32, %c0_i32_0 : i32, i32, i32
  }
  func.func @transform_1(%arg0: i32) -> (i32, i32, i32, i32) {
    %c0_i32 = arith.constant 0 : i32
    %c0_i32_0 = arith.constant 0 : i32
    %c0_i32_1 = arith.constant 0 : i32
    %c0_i32_2 = arith.constant 0 : i32
    return %arg0, %c0_i32, %c0_i32_0, %c0_i32_1 : i32, i32, i32, i32
  }
  func.func @transform_2(%arg0: i32) -> (i32, i32) {
    %c0_i32 = arith.constant 0 : i32
    %c0_i32_0 = arith.constant 0 : i32
    %c0_i32_1 = arith.constant 0 : i32
    return %c0_i32, %c0_i32_0 : i32, i32
  }
  func.func @transform_3(%arg0: i32) -> (i32, i32) {
    %c0_i32 = arith.constant 0 : i32
    %c0_i32_0 = arith.constant 0 : i32
    %c0_i32_1 = arith.constant 0 : i32
    return %c0_i32, %c0_i32_0 : i32, i32
  }
  func.func @transform_4(%arg0: i32) -> (i32, i32, i32) {
    %c0_i32 = arith.constant 0 : i32
    %c0_i32_0 = arith.constant 0 : i32
    %c0_i32_1 = arith.constant 0 : i32
    return %arg0, %c0_i32, %c0_i32_0 : i32, i32, i32
  }
}

</mosaic_0001>

<llo_original>
// kernel: distributed_model_forward.1
$region0: #{distributed_model_forward.1}
  #allocation0 [shape = 'u32[]', space=smem, size = 0x4, offset = 0x4, fixed_abs, tag = 'smem constant byte address 0x4 - core index']
  #allocation1 [shape = 'u32[72,128]{1,0:T(1,128)}', space=vmem, size = 0x9000, scoped, tag = 'internal scratch']
  %s0 = inlined_call_operand.vmem [shape: bf16[2,8,32], index: 0, kind: input, shape index: {}]
  %s1 = inlined_call_operand.vmem [shape: bf16[2,3,16,32], index: 1, kind: input, shape index: {}]
  %s2 = inlined_call_operand.vmem [shape: f32[192,32], index: 2, kind: input, shape index: {}]
  %s3 = inlined_call_operand.vmem [shape: f32[24,32], index: 3, kind: input, shape index: {}]
  %s4 = inlined_call_operand.vmem [shape: f32[2,3,1], index: 4, kind: output, shape index: {}]
  %s5 = sld [smem:[#allocation0]]
  $region49: #{distributed_model_forward.1} parent=0
    _
  %s7 = ssub.s32 1, %s5
  %s8 = scalar_select 0, %s7, %s5
  loop: start=0, step=1, limit=4
  $region2: #{distributed_model_forward.1} parent=0 // loop_pre_header
    _
  $region3: #{distributed_model_forward.1} parent=0 // loop_header
    %s10 = sphi 0, %s14
    %p11 = scmp.ge.s32.totalorder %s10, 4
    %s20 = sphi 0, %s22
    %s23 = sphi 0, %s20
    %s24 = sphi 0, %s23
    %s40 = sphi 0, %s24
    %s46 = sphi 0, %s48
    %s49 = sphi 0, %s46
    %s50 = sphi 0, %s49
    %s66 = sphi 0, %s50
    %s70 = sphi 0, %s70
    %s72 = sphi 0, %s70
    %s73 = sphi 0, %s72
    %s87 = sphi 0, %s73
    %s91 = sphi 0, %s91
    %s93 = sphi 0, %s91
    %s94 = sphi 0, %s93
    %s108 = sphi 0, %s94
    %s114 = sphi 0, %s116
    %s117 = sphi 0, %s114
    %s118 = sphi 0, %s117
    %s134 = sphi 0, %s118
  $region4: #{distributed_model_forward.1} parent=0 // loop_header_branch
    %13 = sbr.rel (%p11) target = $region8
  $region5: #{distributed_model_forward.1} parent=0 // loop_body
    %s15 = ssub.s32 %s10, 1
    %s16 = ssub.s32 %s10, 2
    %s17 = sadd.s32 %s10, 1
    %s18 = ssub.s32 %s10, %s17
    %p19 = scmp.eq.s32.totalorder %s18, 0
    %s21 = sadd.s32 %s20, 1
    %s22 = scalar_select %p19, %s20, %s21
    %p25 = pneg %p19
    %p26 = scmp.eq.s32.totalorder %s10, 1
    %p27 = por %p25, %p26
    %p28 = scmp.ne.s32.totalorder %s20, %s23
    %p29 = scmp.eq.s32.totalorder %s10, 0
    %p30 = por %p28, %p29
    %p31 = scmp.ne.s32.totalorder %s20, %s23
    %p32 = scmp.eq.s32.totalorder %s15, 1
    %p33 = por %p31, %p32
    %p34 = scmp.ne.s32.totalorder %s23, %s24
    %p35 = scmp.eq.s32.totalorder %s15, 0
    %p36 = por %p34, %p35
    %p37 = scmp.ne.s32.totalorder %s23, %s24
    %p38 = scmp.eq.s32.totalorder %s16, 1
    %p39 = por %p37, %p38
    %p41 = scmp.ne.s32.totalorder %s24, %s40
    %p42 = scmp.eq.s32.totalorder %s16, 0
    %p43 = por %p41, %p42
    %s44 = ssub.s32 %s10, %s17
    %p45 = scmp.eq.s32.totalorder %s44, 0
    %s47 = sadd.s32 %s46, 1
    %s48 = scalar_select %p45, %s46, %s47
    %p51 = pneg %p45
    %p52 = scmp.eq.s32.totalorder %s10, 1
    %p53 = por %p51, %p52
    %p54 = scmp.ne.s32.totalorder %s46, %s49
    %p55 = scmp.eq.s32.totalorder %s10, 0
    %p56 = por %p54, %p55
    %p57 = scmp.ne.s32.totalorder %s46, %s49
    %p58 = scmp.eq.s32.totalorder %s15, 1
    %p59 = por %p57, %p58
    %p60 = scmp.ne.s32.totalorder %s49, %s50
    %p61 = scmp.eq.s32.totalorder %s15, 0
    %p62 = por %p60, %p61
    %p63 = scmp.ne.s32.totalorder %s49, %s50
    %p64 = scmp.eq.s32.totalorder %s16, 1
    %p65 = por %p63, %p64
    %p67 = scmp.ne.s32.totalorder %s50, %s66
    %p68 = scmp.eq.s32.totalorder %s16, 0
    %p69 = por %p67, %p68
    %s71 = sadd.s32 %s70, 1
    %p74 = scmp.eq.s32.totalorder %s10, 1
    %p75 = scmp.ne.s32.totalorder %s70, %s72
    %p76 = scmp.eq.s32.totalorder %s10, 0
    %p77 = por %p75, %p76
    %p78 = scmp.ne.s32.totalorder %s70, %s72
    %p79 = scmp.eq.s32.totalorder %s15, 1
    %p80 = por %p78, %p79
    %p81 = scmp.ne.s32.totalorder %s72, %s73
    %p82 = scmp.eq.s32.totalorder %s15, 0
    %p83 = por %p81, %p82
    %p84 = scmp.ne.s32.totalorder %s72, %s73
    %p85 = scmp.eq.s32.totalorder %s16, 1
    %p86 = por %p84, %p85
    %p88 = scmp.ne.s32.totalorder %s73, %s87
    %p89 = scmp.eq.s32.totalorder %s16, 0
    %p90 = por %p88, %p89
    %s92 = sadd.s32 %s91, 1
    %p95 = scmp.eq.s32.totalorder %s10, 1
    %p96 = scmp.ne.s32.totalorder %s91, %s93
    %p97 = scmp.eq.s32.totalorder %s10, 0
    %p98 = por %p96, %p97
    %p99 = scmp.ne.s32.totalorder %s91, %s93
    %p100 = scmp.eq.s32.totalorder %s15, 1
    %p101 = por %p99, %p100
    %p102 = scmp.ne.s32.totalorder %s93, %s94
    %p103 = scmp.eq.s32.totalorder %s15, 0
    %p104 = por %p102, %p103
    %p105 = scmp.ne.s32.totalorder %s93, %s94
    %p106 = scmp.eq.s32.totalorder %s16, 1
    %p107 = por %p105, %p106
    %p109 = scmp.ne.s32.totalorder %s94, %s108
    %p110 = scmp.eq.s32.totalorder %s16, 0
    %p111 = por %p109, %p110
    %s112 = ssub.s32 %s10, %s17
    %p113 = scmp.eq.s32.totalorder %s112, 0
    %s115 = sadd.s32 %s114, 1
    %s116 = scalar_select %p113, %s114, %s115
    %p119 = pneg %p113
    %p120 = scmp.eq.s32.totalorder %s10, 1
    %p121 = por %p119, %p120
    %p122 = scmp.ne.s32.totalorder %s114, %s117
    %p123 = scmp.eq.s32.totalorder %s10, 0
    %p124 = por %p122, %p123
    %p125 = scmp.ne.s32.totalorder %s114, %s117
    %p126 = scmp.eq.s32.totalorder %s15, 1
    %p127 = por %p125, %p126
    %p128 = scmp.ne.s32.totalorder %s117, %s118
    %p129 = scmp.eq.s32.totalorder %s15, 0
    %p130 = por %p128, %p129
    %p131 = scmp.ne.s32.totalorder %s117, %s118
    %p132 = scmp.eq.s32.totalorder %s16, 1
    %p133 = por %p131, %p132
    %p135 = scmp.ne.s32.totalorder %s118, %s134
    %p136 = scmp.eq.s32.totalorder %s16, 0
    %p137 = por %p135, %p136
    %p138 = scmp.le.s32.totalorder 1, %s10
    %p139 = scmp.lt.s32.totalorder %s10, 3
    %p140 = pnand %p138, %p139
    %p141 = pneg %p140
    // Predicated region
    $region9: #{distributed_model_forward.1} parent=5 // pred_check
      _
    $region10: #{distributed_model_forward.1} parent=5 // pred_check_branch
      %143 = sbr.rel (%p140) target = $region12
    $region11: #{distributed_model_forward.1} parent=5 // pred_region
      %s144 = ssub.s32 %s10, 1
      // Predicated region
      $region13: #{distributed_model_forward.1} parent=11 // pred_check
        %p145 = pneg %p83
      $region14: #{distributed_model_forward.1} parent=11 // pred_check_branch
        %147 = sbr.rel (%p145) target = $region16
      $region15: #{distributed_model_forward.1} parent=11 // pred_region
        _
      $region16: #{distributed_model_forward.1} parent=11 // pred_fallthru
        _
      // Predicated region
      $region17: #{distributed_model_forward.1} parent=11 // pred_check
        %p148 = pneg %p104
      $region18: #{distributed_model_forward.1} parent=11 // pred_check_branch
        %150 = sbr.rel (%p148) target = $region20
      $region19: #{distributed_model_forward.1} parent=11 // pred_region
        _
      $region20: #{distributed_model_forward.1} parent=11 // pred_fallthru
        _
    $region12: #{distributed_model_forward.1} parent=5 // pred_fallthru
      _
    %p151 = scmp.lt.s32.totalorder %s10, 2
    // Predicated region
    $region21: #{distributed_model_forward.1} parent=5 // pred_check
      %p152 = pneg %p151
    $region22: #{distributed_model_forward.1} parent=5 // pred_check_branch
      %154 = sbr.rel (%p152) target = $region24
    $region23: #{distributed_model_forward.1} parent=5 // pred_region
      // Predicated region
      $region25: #{distributed_model_forward.1} parent=23 // pred_check
        %p155 = pneg %p30
      $region26: #{distributed_model_forward.1} parent=23 // pred_check_branch
        %157 = sbr.rel (%p155) target = $region28
      $region27: #{distributed_model_forward.1} parent=23 // pred_region
        %p158 = scmp.lt.s32.totalorder %s10, 1
        %s159 = scalar_select %p158, %s10, 1
        %s160 = smul.addr %s159, 4
        %s161 = scalar_lea.vmem %s0, %s160
      $region28: #{distributed_model_forward.1} parent=23 // pred_fallthru
        _
      // Predicated region
      $region29: #{distributed_model_forward.1} parent=23 // pred_check
        %p162 = pneg %p56
      $region30: #{distributed_model_forward.1} parent=23 // pred_check_branch
        %164 = sbr.rel (%p162) target = $region32
      $region31: #{distributed_model_forward.1} parent=23 // pred_region
        %p165 = scmp.lt.s32.totalorder %s10, 1
        %s166 = scalar_select %p165, %s10, 1
        %s167 = smul.addr %s166, 6
        %s168 = smul.addr %s167, 4
        %s169 = scalar_lea.vmem %s1, %s168
      $region32: #{distributed_model_forward.1} parent=23 // pred_fallthru
        _
    $region24: #{distributed_model_forward.1} parent=5 // pred_fallthru
      _
    %p170 = scmp.le.s32.totalorder 1, %s10
    %p171 = scmp.lt.s32.totalorder %s10, 3
    %p172 = pnand %p170, %p171
    %p173 = pneg %p172
    // Predicated region
    $region33: #{distributed_model_forward.1} parent=5 // pred_check
      _
    $region34: #{distributed_model_forward.1} parent=5 // pred_check_branch
      %175 = sbr.rel (%p172) target = $region36
    $region35: #{distributed_model_forward.1} parent=5 // pred_region
      %s176 = ssub.s32 %s10, 1
      %p177 = scmp.lt.s32.totalorder %s15, 1
      %s178 = scalar_select %p177, %s15, 1
      %s179 = smul.addr %s178, 4
      %s180 = scalar_lea.vmem %s0, %s179
      %p181 = pneg %p36
      %p182 = pneg %p33
      %p183 = scmp.lt.s32.totalorder %s15, 1
      %s184 = scalar_select %p183, %s15, 1
      %s185 = smul.addr %s184, 6
      %s186 = smul.addr %s185, 4
      %s187 = scalar_lea.vmem %s1, %s186
      %p188 = pneg %p62
      %p189 = pneg %p59
      %p190 = pneg %p83
      %p191 = pneg %p80
      %p192 = pneg %p104
      %p193 = pneg %p101
      %p194 = pneg %p130
      %p195 = pneg %p127
      %p196 = scmp.lt.s32.totalorder %s15, 1
      %s197 = scalar_select %p196, %s15, 1
      %s198 = smul.addr %s197, 4
      %s199 = scalar_lea.vmem %s4, %s198
      %p200 = scmp.lt.s32.totalorder %s15, 1
      %s201 = scalar_select %p200, %s15, 1
      %s202 = smul.addr %s201, 4
      %s203 = scalar_lea.vmem %s0, %s202
      %p204 = scmp.lt.s32.totalorder %s15, 1
      %s205 = scalar_select %p204, %s15, 1
      %s206 = smul.addr %s205, 6
      %s207 = smul.addr %s206, 4
      %s208 = scalar_lea.vmem %s1, %s207
      %p209 = scmp.lt.s32.totalorder %s15, 1
      %s210 = scalar_select %p209, %s15, 1
      %s211 = smul.addr %s210, 4
      %s212 = scalar_lea.vmem %s4, %s211
      %v213 = vld [vmem:[%s203] sm:$0xf]
      %v214 = vunpack.c.l.bf16 %v213
      %v215 = vld [vmem:[%s208] sm:$0xf]
      %v216 = vld [vmem:[%s208 + $0x4] sm:$0xf]
      %v217 = vld [vmem:[%s208 + $0x8] sm:$0xf]
      %v218 = vld [vmem:[%s208 + $0xc] sm:$0xf]
      %v219 = vld [vmem:[%s208 + $0x10] sm:$0xf]
      %v220 = vld [vmem:[%s208 + $0x14] sm:$0xf]
      %v221 = vunpack.c.l.bf16 %v215
      %v222 = vunpack.c.l.bf16 %v216
      %v223 = vunpack.c.l.bf16 %v217
      %v224 = vunpack.c.l.bf16 %v218
      %v225 = vunpack.c.l.bf16 %v219
      %v226 = vunpack.c.l.bf16 %v220
      %v227 = vld [vmem:[%s2] sm:$0xff]
      %v228 = vld [vmem:[%s2 + $0x8] sm:$0xff]
      %v229 = vld [vmem:[%s2 + $0x10] sm:$0xff]
      %v230 = vld [vmem:[%s2 + $0x18] sm:$0xff]
      %v231 = vld [vmem:[%s2 + $0x20] sm:$0xff]
      %v232 = vld [vmem:[%s2 + $0x28] sm:$0xff]
      %v233 = vld [vmem:[%s2 + $0x30] sm:$0xff]
      %v234 = vld [vmem:[%s2 + $0x38] sm:$0xff]
      %vm235 = vcmask 261120
      %v237 = vsel %vm235, %v214, 0
      %v240 = vsel %vm235, %v221, 0
      %v243 = vsel %vm235, %v222, 0
      %v246 = vsel %vm235, %v223, 0
      %v249 = vsel %vm235, %v224, 0
      %v252 = vsel %vm235, %v225, 0
      %v255 = vsel %vm235, %v226, 0
      %257 = vmatpush.msra.mxu0 0.0
      %258 = vmatpush.msra.mxu0 0.0
      %259 = vmatpush.msra.mxu0 0.0
      %260 = vmatpush.msra.mxu0 0.0
      %261 = vmatpush.msra.mxu0 0.0
      %262 = vmatpush.msra.mxu0 0.0
      %263 = vmatpush.msra.mxu0 0.0
      %264 = vmatpush.msra.mxu0 0.0
      %265 = vmatpush.msra.mxu0 0.0
      %266 = vmatpush.msra.mxu0 0.0
      %267 = vmatpush.msra.mxu0 0.0
      %268 = vmatpush.msra.mxu0 0.0
      %269 = vmatpush.msra.mxu0 %v234
      %270 = vmatpush.msra.mxu0 %v233
      %271 = vmatpush.msra.mxu0 %v232
      %272 = vmatpush.msra.mxu0 %v231
      %273 = vmatmul.f32.gmra.mxu0 %v237
      %v274 = vpop.f32.mrf.mxu0
      %v275 = vadd.f32 0.0, %v274
      %276 = vmatmul.f32.gmra.mxu0 %v240
      %v277 = vpop.f32.mrf.mxu0
      %v278 = vadd.f32 0.0, %v277
      %279 = vmatmul.f32.gmra.mxu0 %v243
      %v280 = vpop.f32.mrf.mxu0
      %v281 = vadd.f32 0.0, %v280
      %282 = vmatmul.f32.gmra.mxu0 %v246
      %v283 = vpop.f32.mrf.mxu0
      %v284 = vadd.f32 0.0, %v283
      %285 = vmatmul.f32.gmra.mxu0 %v249
      %v286 = vpop.f32.mrf.mxu0
      %v287 = vadd.f32 0.0, %v286
      %288 = vmatmul.f32.gmra.mxu0 %v252
      %v289 = vpop.f32.mrf.mxu0
      %v290 = vadd.f32 0.0, %v289
      %291 = vmatmul.f32.gmra.mxu0 %v255
      %v292 = vpop.f32.mrf.mxu0
      %v293 = vadd.f32 0.0, %v292
      %294 = vdwg.mxu0
      %v295 = vld [vmem:[%s2 + $0x40] sm:$0xff]
      %v296 = vld [vmem:[%s2 + $0x48] sm:$0xff]
      %v297 = vld [vmem:[%s2 + $0x50] sm:$0xff]
      %v298 = vld [vmem:[%s2 + $0x58] sm:$0xff]
      %299 = vmatpush.msra.mxu0 0.0
      %300 = vmatpush.msra.mxu0 0.0
      %301 = vmatpush.msra.mxu0 0.0
      %302 = vmatpush.msra.mxu0 0.0
      %303 = vmatpush.msra.mxu0 0.0
      %304 = vmatpush.msra.mxu0 0.0
      %305 = vmatpush.msra.mxu0 0.0
      %306 = vmatpush.msra.mxu0 0.0
      %307 = vmatpush.msra.mxu0 0.0
      %308 = vmatpush.msra.mxu0 0.0
      %309 = vmatpush.msra.mxu0 0.0
      %310 = vmatpush.msra.mxu0 0.0
      %311 = vmatpush.msra.mxu0 %v298
      %312 = vmatpush.msra.mxu0 %v297
      %313 = vmatpush.msra.mxu0 %v296
      %314 = vmatpush.msra.mxu0 %v295
      %315 = vmatmul.f32.gmra.mxu0 %v237
      %v316 = vpop.f32.mrf.mxu0
      %v317 = vadd.f32 0.0, %v316
      %318 = vmatmul.f32.gmra.mxu0 %v240
      %v319 = vpop.f32.mrf.mxu0
      %v320 = vadd.f32 0.0, %v319
      %321 = vmatmul.f32.gmra.mxu0 %v243
      %v322 = vpop.f32.mrf.mxu0
      %v323 = vadd.f32 0.0, %v322
      %324 = vmatmul.f32.gmra.mxu0 %v246
      %v325 = vpop.f32.mrf.mxu0
      %v326 = vadd.f32 0.0, %v325
      %327 = vmatmul.f32.gmra.mxu0 %v249
      %v328 = vpop.f32.mrf.mxu0
      %v329 = vadd.f32 0.0, %v328
      %330 = vmatmul.f32.gmra.mxu0 %v252
      %v331 = vpop.f32.mrf.mxu0
      %v332 = vadd.f32 0.0, %v331
      %333 = vmatmul.f32.gmra.mxu0 %v255
      %v334 = vpop.f32.mrf.mxu0
      %v335 = vadd.f32 0.0, %v334
      %336 = vdwg.mxu0
      %v337 = vld [vmem:[%s3 + $0x10] sm:$0x1]
      %vm345 = vcmask 1046528
      %v346 = vrot.slane %v275, 1
      %v347 = vrot.slane %v278, 1
      %v348 = vsel %vm345, %v346, %v347
      %v349 = vrot.slane %v281, 1
      %v350 = vsel %vm345, %v347, %v349
      %v351 = vrot.slane %v284, 1
      %v352 = vsel %vm345, %v349, %v351
      %v353 = vrot.slane %v287, 1
      %v354 = vsel %vm345, %v351, %v353
      %v355 = vrot.slane %v290, 1
      %v356 = vsel %vm345, %v353, %v355
      %v357 = vrot.slane %v293, 1
      %v358 = vsel %vm345, %v355, %v357
      %v367 = vsel %vm345, %v357, %v346
      %368 = vmatpush.msra.mxu0 0.0
      %369 = vmatpush.msra.mxu0 0.0
      %370 = vmatpush.msra.mxu0 0.0
      %371 = vmatpush.msra.mxu0 0.0
      %372 = vmatpush.msra.mxu0 0.0
      %373 = vmatpush.msra.mxu0 0.0
      %374 = vmatpush.msra.mxu0 0.0
      %375 = vmatpush.msra.mxu0 0.0
      %376 = vmatpush.msra.mxu0 0.0
      %377 = vmatpush.msra.mxu0 0.0
      %378 = vmatpush.msra.mxu0 0.0
      %379 = vmatpush.msra.mxu0 0.0
      %380 = vmatpush.msra.mxu0 %v230
      %381 = vmatpush.msra.mxu0 %v229
      %382 = vmatpush.msra.mxu0 %v228
      %383 = vmatpush.msra.mxu0 %v227
      %384 = vmatmul.f32.gmra.mxu0 %v237
      %v385 = vpop.f32.mrf.mxu0
      %v386 = vadd.f32 %v348, %v385
      %387 = vmatmul.f32.gmra.mxu0 %v240
      %v388 = vpop.f32.mrf.mxu0
      %v389 = vadd.f32 %v350, %v388
      %390 = vmatmul.f32.gmra.mxu0 %v243
      %v391 = vpop.f32.mrf.mxu0
      %v392 = vadd.f32 %v352, %v391
      %393 = vmatmul.f32.gmra.mxu0 %v246
      %v394 = vpop.f32.mrf.mxu0
      %v395 = vadd.f32 %v354, %v394
      %396 = vmatmul.f32.gmra.mxu0 %v249
      %v397 = vpop.f32.mrf.mxu0
      %v398 = vadd.f32 %v356, %v397
      %399 = vmatmul.f32.gmra.mxu0 %v252
      %v400 = vpop.f32.mrf.mxu0
      %v401 = vadd.f32 %v358, %v400
      %402 = vmatmul.f32.gmra.mxu0 %v255
      %v403 = vpop.f32.mrf.mxu0
      %v404 = vadd.f32 %v367, %v403
      %405 = vdwg.mxu0
      %vm413 = vcmask 1045504
      %v414 = vrot.slane %v317, 2
      %v415 = vrot.slane %v320, 2
      %v416 = vsel %vm413, %v414, %v415
      %v417 = vrot.slane %v323, 2
      %v418 = vsel %vm413, %v415, %v417
      %v419 = vrot.slane %v326, 2
      %v420 = vsel %vm413, %v417, %v419
      %v421 = vrot.slane %v329, 2
      %v422 = vsel %vm413, %v419, %v421
      %v423 = vrot.slane %v332, 2
      %v424 = vsel %vm413, %v421, %v423
      %v425 = vrot.slane %v335, 2
      %v426 = vsel %vm413, %v423, %v425
      %v435 = vsel %vm413, %v425, %v414
      %v436 = vadd.f32 %v386, %v416
      %v437 = vadd.f32 %v389, %v418
      %v438 = vadd.f32 %v392, %v420
      %v439 = vadd.f32 %v395, %v422
      %v440 = vadd.f32 %v398, %v424
      %v441 = vadd.f32 %v401, %v426
      %v442 = vadd.f32 %v404, %v435
      %v443 = vperm.slane %v337, 0
      %v444 = vadd.f32 %v436, %v443
      %v445 = vadd.f32 %v437, %v443
      %v446 = vadd.f32 %v438, %v443
      %v447 = vadd.f32 %v439, %v443
      %v448 = vadd.f32 %v440, %v443
      %v449 = vadd.f32 %v441, %v443
      %v450 = vadd.f32 %v442, %v443
      %vm451 = vcmask 259072
      %v452 = vsel %vm451, %v444, -inf
      %v453 = vrot.slane %v452, 4
      %v454 = vmax.f32 %v452, %v453
      %v455 = vrot.slane %v454, 2
      %v456 = vmax.f32 %v454, %v455
      %v457 = vrot.slane %v456, 1
      %v458 = vmax.f32 %v456, %v457
      %v459 = vld [vmem:[%s2 + $0x80] sm:$0xff]
      %v460 = vld [vmem:[%s2 + $0x88] sm:$0xff]
      %v461 = vld [vmem:[%s2 + $0x90] sm:$0xff]
      %v462 = vld [vmem:[%s2 + $0x98] sm:$0xff]
      %v463 = vld [vmem:[%s3 + $0x11] sm:$0x1]
      %v465 = vsel %vm235, %v458, 0
      %467 = vmatpush.msra.mxu0 0.0
      %468 = vmatpush.msra.mxu0 0.0
      %469 = vmatpush.msra.mxu0 0.0
      %470 = vmatpush.msra.mxu0 0.0
      %471 = vmatpush.msra.mxu0 0.0
      %472 = vmatpush.msra.mxu0 0.0
      %473 = vmatpush.msra.mxu0 0.0
      %474 = vmatpush.msra.mxu0 0.0
      %475 = vmatpush.msra.mxu0 0.0
      %476 = vmatpush.msra.mxu0 0.0
      %477 = vmatpush.msra.mxu0 0.0
      %478 = vmatpush.msra.mxu0 0.0
      %479 = vmatpush.msra.mxu0 %v462
      %480 = vmatpush.msra.mxu0 %v461
      %481 = vmatpush.msra.mxu0 %v460
      %482 = vmatpush.msra.mxu0 %v459
      %483 = vmatmul.f32.gmra.mxu0 %v465
      %v484 = vpop.f32.mrf.mxu0
      %v485 = vadd.f32 %v463, %v484
      %486 = vdwg.mxu0
      %v487 = vtanh.pop %v485
      %v494 = vrot.slane %v445, 1
      %v495 = vrot.slane %v446, 1
      %v496 = vsel %vm345, %v494, %v495
      %v497 = vrot.slane %v447, 1
      %v498 = vsel %vm345, %v495, %v497
      %v499 = vrot.slane %v448, 1
      %v500 = vsel %vm345, %v497, %v499
      %v501 = vrot.slane %v449, 1
      %v502 = vsel %vm345, %v499, %v501
      %v503 = vrot.slane %v450, 1
      %v504 = vsel %vm345, %v501, %v503
      %v512 = vsel %vm345, %v503, %v494
      %v513 = vmax.f32 %v445, %v496
      %v514 = vmax.f32 %v446, %v498
      %v515 = vmax.f32 %v447, %v500
      %v516 = vmax.f32 %v448, %v502
      %v517 = vmax.f32 %v449, %v504
      %v518 = vmax.f32 %v450, %v512
      %v519 = vrot.slane %v445, 2
      %v520 = vrot.slane %v446, 2
      %v521 = vsel %vm413, %v519, %v520
      %v522 = vrot.slane %v447, 2
      %v523 = vsel %vm413, %v520, %v522
      %v524 = vrot.slane %v448, 2
      %v525 = vsel %vm413, %v522, %v524
      %v526 = vrot.slane %v449, 2
      %v527 = vsel %vm413, %v524, %v526
      %v528 = vrot.slane %v450, 2
      %v529 = vsel %vm413, %v526, %v528
      %v537 = vsel %vm413, %v528, %v519
      %v538 = vmax.f32 %v513, %v521
      %v539 = vmax.f32 %v514, %v523
      %v540 = vmax.f32 %v515, %v525
      %v541 = vmax.f32 %v516, %v527
      %v542 = vmax.f32 %v517, %v529
      %v543 = vmax.f32 %v518, %v537
      %vm544 = vcmask 1044480
      %v545 = vrot.slane %v445, 3
      %v546 = vrot.slane %v446, 3
      %v547 = vsel %vm544, %v545, %v546
      %v548 = vrot.slane %v447, 3
      %v549 = vsel %vm544, %v546, %v548
      %v550 = vrot.slane %v448, 3
      %v551 = vsel %vm544, %v548, %v550
      %v552 = vrot.slane %v449, 3
      %v553 = vsel %vm544, %v550, %v552
      %v554 = vrot.slane %v450, 3
      %v555 = vsel %vm544, %v552, %v554
      %v563 = vsel %vm544, %v554, %v545
      %v564 = vmax.f32 %v538, %v547
      %v565 = vmax.f32 %v539, %v549
      %v566 = vmax.f32 %v540, %v551
      %v567 = vmax.f32 %v541, %v553
      %v568 = vmax.f32 %v542, %v555
      %v569 = vmax.f32 %v543, %v563
      %v570 = vld [vmem:[%s3] sm:$0xff]
      %v571 = vld [vmem:[%s3 + $0x8] sm:$0xff]
      %v572 = vmul.f32 %v564, %v570
      %v573 = vmul.f32 %v565, %v571
      %v574 = vmul.f32 %v566, %v570
      %v575 = vmul.f32 %v567, %v571
      %v576 = vmul.f32 %v568, %v570
      %v577 = vmul.f32 %v569, %v571
      %v578 = vsel %vm235, %v572, 0.0
      %v579 = vsel %vm235, %v573, 0.0
      %v580 = vadd.f32 %v578, %v579
      %v581 = vrot.slane %v580, 4
      %v582 = vadd.f32 %v580, %v581
      %v583 = vrot.slane %v582, 2
      %v584 = vadd.f32 %v582, %v583
      %v585 = vrot.slane %v584, 1
      %v586 = vadd.f32 %v584, %v585
      %v587 = vsel %vm235, %v574, 0.0
      %v588 = vsel %vm235, %v575, 0.0
      %v589 = vadd.f32 %v587, %v588
      %v590 = vrot.slane %v589, 4
      %v591 = vadd.f32 %v589, %v590
      %v592 = vrot.slane %v591, 2
      %v593 = vadd.f32 %v591, %v592
      %v594 = vrot.slane %v593, 1
      %v595 = vadd.f32 %v593, %v594
      %v596 = vsel %vm235, %v576, 0.0
      %v597 = vsel %vm235, %v577, 0.0
      %v598 = vadd.f32 %v596, %v597
      %v599 = vrot.slane %v598, 4
      %v600 = vadd.f32 %v598, %v599
      %v601 = vrot.slane %v600, 2
      %v602 = vadd.f32 %v600, %v601
      %v603 = vrot.slane %v602, 1
      %v604 = vadd.f32 %v602, %v603
      %v605 = vld [vmem:[%s2 + $0x60] sm:$0xff]
      %v606 = vld [vmem:[%s2 + $0x68] sm:$0xff]
      %v607 = vld [vmem:[%s2 + $0x70] sm:$0xff]
      %v608 = vld [vmem:[%s2 + $0x78] sm:$0xff]
      %v609 = vld [vmem:[%s3 + $0x12] sm:$0x1]
      %v610 = vperm.slane %v609, 0
      %vm614 = vcmask 1041409
      %v615 = vsel %vm614, %v595, %v586
      %vm616 = vcmask 1042434
      %v617 = vsel %vm616, %v604, %v615
      %v618 = vsel %vm235, %v617, 0
      %620 = vmatpush.msra.mxu0 0.0
      %621 = vmatpush.msra.mxu0 0.0
      %622 = vmatpush.msra.mxu0 0.0
      %623 = vmatpush.msra.mxu0 0.0
      %624 = vmatpush.msra.mxu0 0.0
      %625 = vmatpush.msra.mxu0 0.0
      %626 = vmatpush.msra.mxu0 0.0
      %627 = vmatpush.msra.mxu0 0.0
      %628 = vmatpush.msra.mxu0 0.0
      %629 = vmatpush.msra.mxu0 0.0
      %630 = vmatpush.msra.mxu0 0.0
      %631 = vmatpush.msra.mxu0 0.0
      %632 = vmatpush.msra.mxu0 %v608
      %633 = vmatpush.msra.mxu0 %v607
      %634 = vmatpush.msra.mxu0 %v606
      %635 = vmatpush.msra.mxu0 %v605
      %636 = vmatmul.f32.gmra.mxu0 %v618
      %v637 = vpop.f32.mrf.mxu0
      %v638 = vadd.f32 %v610, %v637
      %639 = vdwg.mxu0
      %v640 = vld [vmem:[%s3 + $0x15] sm:$0x1]
      %v641 = vperm.slane %v487, 0
      %v642 = vmul.f32 %v638, %v641
      %s644 = vtos %v640
      %v645 = vstv %s644
      %v647 = vadd.f32 %v642, %v645
      %v648 = vtanh.pop %v647
      %v649 = vld [vmem:[%s2 + $0xa0] sm:$0xff]
      %v650 = vld [vmem:[%s2 + $0xa8] sm:$0xff]
      %v651 = vld [vmem:[%s2 + $0xb0] sm:$0xff]
      %v652 = vld [vmem:[%s2 + $0xb8] sm:$0xff]
      %v653 = vld [vmem:[%s3 + $0x13] sm:$0x1]
      %v654 = vperm.slane %v653, 0
      %v656 = vsel %vm235, %v648, 0
      %658 = vmatpush.msra.mxu0 0.0
      %659 = vmatpush.msra.mxu0 0.0
      %660 = vmatpush.msra.mxu0 0.0
      %661 = vmatpush.msra.mxu0 0.0
      %662 = vmatpush.msra.mxu0 0.0
      %663 = vmatpush.msra.mxu0 0.0
      %664 = vmatpush.msra.mxu0 0.0
      %665 = vmatpush.msra.mxu0 0.0
      %666 = vmatpush.msra.mxu0 0.0
      %667 = vmatpush.msra.mxu0 0.0
      %668 = vmatpush.msra.mxu0 0.0
      %669 = vmatpush.msra.mxu0 0.0
      %670 = vmatpush.msra.mxu0 %v652
      %671 = vmatpush.msra.mxu0 %v651
      %672 = vmatpush.msra.mxu0 %v650
      %673 = vmatpush.msra.mxu0 %v649
      %674 = vmatmul.f32.gmra.mxu0 %v656
      %v675 = vpop.f32.mrf.mxu0
      %v676 = vadd.f32 %v654, %v675
      %677 = vdwg.mxu0
      %v678 = vtanh.pop %v676
      %v679 = vld [vmem:[%s3 + $0x14] sm:$0x1]
      %v680 = vld [vmem:[%s3 + $0x16] sm:$0x1]
      %v681 = vperm.slane %v679, 0
      %v682 = vmul.f32 %v678, %v681
      %vm683 = vcmask 256000
      %v684 = vsel %vm683, %v682, 0.0
      %685 = vadd.xlane.f32.xlu0 %v684
      %v686 = vpop.xlane.xlu0 %685
      %v687 = vperm.slane %v680, 0
      %v688 = vadd.f32 %v686, %v687
      %v689 = vtanh.pop %v688
      %vm690 = vcmask 2048
      %691 = vst.msk [vmem:[%s212] sm:$0x7] %vm690, %v689
      %p692 = scmp.lt.s32.totalorder %s15, 1
      %s693 = scalar_select %p692, %s15, 1
      %s694 = smul.addr %s693, 4
      %s695 = scalar_lea.vmem %s4, %s694
      // Predicated region
      $region37: #{distributed_model_forward.1} parent=35 // pred_check
        %p696 = pneg %p127
      $region38: #{distributed_model_forward.1} parent=35 // pred_check_branch
        %698 = sbr.rel (%p696) target = $region40
      $region39: #{distributed_model_forward.1} parent=35 // pred_region
        _
      $region40: #{distributed_model_forward.1} parent=35 // pred_fallthru
        _
    $region36: #{distributed_model_forward.1} parent=5 // pred_fallthru
      _
    %p699 = scmp.le.s32.totalorder 2, %s10
    // Predicated region
    $region41: #{distributed_model_forward.1} parent=5 // pred_check
      %p700 = pneg %p699
    $region42: #{distributed_model_forward.1} parent=5 // pred_check_branch
      %702 = sbr.rel (%p700) target = $region44
    $region43: #{distributed_model_forward.1} parent=5 // pred_region
      %s703 = ssub.s32 %s10, 2
      // Predicated region
      $region45: #{distributed_model_forward.1} parent=43 // pred_check
        %p704 = pneg %p133
      $region46: #{distributed_model_forward.1} parent=43 // pred_check_branch
        %706 = sbr.rel (%p704) target = $region48
      $region47: #{distributed_model_forward.1} parent=43 // pred_region
        %p707 = scmp.lt.s32.totalorder %s16, 1
        %s708 = scalar_select %p707, %s16, 1
        %s709 = smul.addr %s708, 4
        %s710 = scalar_lea.vmem %s4, %s709
      $region48: #{distributed_model_forward.1} parent=43 // pred_fallthru
        _
    $region44: #{distributed_model_forward.1} parent=5 // pred_fallthru
      _
  $region6: #{distributed_model_forward.1} parent=0 // loop_footer
    %s14 = sadd.s32 1, %s10
  $region7: #{distributed_model_forward.1} parent=0 // loop_footer_branch
    %9 = sbr.rel target = $region3
  $region8: #{distributed_model_forward.1} parent=0 // loop_exit
    _

</llo_original>
